<compile_context>
chip_gen: v5e
topology: v5e:2x2
jax: 0.10.0
libtpu: 0.0.40
codegen_flags: <defaults>
</compile_context>

<pallas_src>
import math
import jax
import jax.numpy as jnp
from jax.experimental import pallas as pl
from jax.experimental.pallas import tpu as pltpu


def value_net_kernel(x_ref, w1_ref, b1_ref, w2_ref, b2_ref, w3_ref, b3_ref, out_ref):
    x = x_ref[...]
    # linear1 + relu  (MXU matmul, f32 accumulate; VPU bias-add / relu)
    h1 = jnp.dot(x, w1_ref[...], preferred_element_type=jnp.float32) + b1_ref[...]
    h1 = jnp.maximum(h1, 0.0)
    # linear2 + relu
    h2 = jnp.dot(h1, w2_ref[...], preferred_element_type=jnp.float32) + b2_ref[...]
    h2 = jnp.maximum(h2, 0.0)
    # linear3 (out_features == 1): VPU multiply + lane reduction instead of an
    # N=1 MXU matmul (which would use a sliver of the array and pad w3 to 128 lanes).
    out_ref[...] = (
        jnp.sum(h2 * w3_ref[...], axis=-1, keepdims=True) + b3_ref[...]
    )


def _round_up(x, m):
    return ((x + m - 1) // m) * m


def value_network_forward(state, params, *, block_batch=512):
    """state: (B, state_dim) f32.  params: dict of w1,b1,w2,b2,w3,b3.

    Returns (B, 1) f32. Tiles the batch axis into TB-row blocks; weights stay
    VMEM-resident across the grid.
    """
    B, state_dim = state.shape
    w1, b1, w2, b2, w3, b3 = (params[k] for k in ("w1", "b1", "w2", "b2", "w3", "b3"))
    hidden = w1.shape[1]

    # Batch tile: big enough to amortize per-step overhead, but never larger than
    # the (8-aligned) batch itself. Pad the batch so every grid block is full.
    TB = min(block_batch, _round_up(B, 8))
    B_pad = _round_up(B, TB)
    if B_pad != B:
        state = jnp.pad(state, ((0, B_pad - B), (0, 0)))
    grid = (B_pad // TB,)

    # Rough VMEM budget (double-buffered state/out tiles + resident weights +
    # intermediates), with headroom; keeps us explicit on v7x's 64 MiB VMEM.
    est_bytes = 4 * (
        2 * TB * state_dim          # state double buffer
        + 2 * TB * 1                # output double buffer
        + state_dim * hidden + hidden
        + hidden * hidden + hidden
        + hidden + 1
        + 2 * TB * hidden           # h1, h2 intermediates
    )
    vmem_limit = int(min(max(4 * est_bytes, 8 << 20), 64 << 20))

    resident = lambda shape: pl.BlockSpec(shape, lambda i: (0, 0))

    out = pl.pallas_call(
        value_net_kernel,
        out_shape=jax.ShapeDtypeStruct((B_pad, 1), jnp.float32),
        grid=grid,
        in_specs=[
            pl.BlockSpec((TB, state_dim), lambda i: (i, 0)),   # state: tiled on batch
            resident((state_dim, hidden)),                     # w1
            resident((1, hidden)),                             # b1
            resident((hidden, hidden)),                        # w2
            resident((1, hidden)),                             # b2
            resident((1, hidden)),                             # w3 as lane-dense row
            resident((1, 1)),                                  # b3
        ],
        out_specs=pl.BlockSpec((TB, 1), lambda i: (i, 0)),
        compiler_params=pltpu.CompilerParams(
            dimension_semantics=("parallel",),                 # megacore on v7x
            vmem_limit_bytes=vmem_limit,
        ),
    )(state, w1, b1, w2, b2, w3, b3)

    return out[:B]


def init_value_network_params(key, state_dim, hidden_dim, init_w=0.003):
    """Synthetic init mirroring the PyTorch module's __init__.

    linear1/linear2: PyTorch default nn.Linear init, U(-1/sqrt(fan_in), 1/sqrt(fan_in)).
    linear3: U(-init_w, init_w) for both weight and bias.
    w1/w2 stored as (in, out); w3 stored as a (1, hidden) row; biases as (1, out).
    """
    ks = jax.random.split(key, 6)

    def uniform(k, shape, bound):
        return jax.random.uniform(k, shape, jnp.float32, -bound, bound)

    b1lim = 1.0 / math.sqrt(state_dim)
    b2lim = 1.0 / math.sqrt(hidden_dim)
    return {
        "w1": uniform(ks[0], (state_dim, hidden_dim), b1lim),
        "b1": uniform(ks[1], (1, hidden_dim), b1lim),
        "w2": uniform(ks[2], (hidden_dim, hidden_dim), b2lim),
        "b2": uniform(ks[3], (1, hidden_dim), b2lim),
        "w3": uniform(ks[4], (1, hidden_dim), init_w),   # row layout (lane-dense)
        "b3": uniform(ks[5], (1, 1), init_w),
    }


def value_network_ref(state, params):
    """Pure-JAX reference for correctness check."""
    h1 = jnp.maximum(state @ params["w1"] + params["b1"], 0.0)
    h2 = jnp.maximum(h1 @ params["w2"] + params["b2"], 0.0)
    return jnp.sum(h2 * params["w3"], axis=-1, keepdims=True) + params["b3"]


if __name__ == "__main__":
    key = jax.random.PRNGKey(0)
    k_params, k_state, k_state2 = jax.random.split(key, 3)

    # Small shapes consistent with the SAC module.
    batch, state_dim, hidden_dim = 8, 4, 32
    params = init_value_network_params(k_params, state_dim, hidden_dim, init_w=0.003)
    state = jax.random.normal(k_state, (batch, state_dim), dtype=jnp.float32)

    out = jax.block_until_ready(value_network_forward(state, params))
    ref = value_network_ref(state, params)
    assert out.shape == (batch, 1), out.shape
    assert jnp.allclose(out, ref, atol=1e-5, rtol=1e-5), (out, ref)

    # Exercise the multi-block grid + batch-padding path (grid > 1, ragged batch).
    big_batch = 1040
    state2 = jax.random.normal(k_state2, (big_batch, state_dim), dtype=jnp.float32)
    out2 = jax.block_until_ready(value_network_forward(state2, params, block_batch=512))
    ref2 = value_network_ref(state2, params)
    assert out2.shape == (big_batch, 1), out2.shape
    assert jnp.allclose(out2, ref2, atol=1e-5, rtol=1e-5)

    print("KERNEL_OK")
</pallas_src>

<mosaic_0001>
module attributes {stable_mosaic.version = 11 : i64} {
  func.func @value_net_kernel(%arg0: i32, %arg1: memref<8x4xf32, #tpu.memory_space<vmem>>, %arg2: memref<4x32xf32, #tpu.memory_space<vmem>>, %arg3: memref<1x32xf32, #tpu.memory_space<vmem>>, %arg4: memref<32x32xf32, #tpu.memory_space<vmem>>, %arg5: memref<1x32xf32, #tpu.memory_space<vmem>>, %arg6: memref<1x32xf32, #tpu.memory_space<vmem>>, %arg7: memref<1x1xf32, #tpu.memory_space<vmem>>, %arg8: memref<8x1xf32, #tpu.memory_space<vmem>>) attributes {dimension_semantics = [#tpu.dimension_semantics<parallel>], iteration_bounds = array<i64: 1>, scalar_prefetch = 0 : i64, scratch_operands = 0 : i64, tpu.core_type = #tpu.core_type<tc>, window_params = [{transform_indices = @transform_0, window_bounds = array<i64: 8, 4>}, {pipeline_mode = #tpu.pipeline_mode<synchronous>, transform_indices = @transform_1, window_bounds = array<i64: 4, 32>}, {pipeline_mode = #tpu.pipeline_mode<synchronous>, transform_indices = @transform_2, window_bounds = array<i64: 1, 32>}, {pipeline_mode = #tpu.pipeline_mode<synchronous>, transform_indices = @transform_3, window_bounds = array<i64: 32, 32>}, {pipeline_mode = #tpu.pipeline_mode<synchronous>, transform_indices = @transform_4, window_bounds = array<i64: 1, 32>}, {pipeline_mode = #tpu.pipeline_mode<synchronous>, transform_indices = @transform_5, window_bounds = array<i64: 1, 32>}, {pipeline_mode = #tpu.pipeline_mode<synchronous>, transform_indices = @transform_6, window_bounds = array<i64: 1, 1>}, {transform_indices = @transform_7, window_bounds = array<i64: 8, 1>}]} {
    %c0 = arith.constant 0 : index
    %c0_0 = arith.constant 0 : index
    %0 = vector.load %arg1[%c0, %c0_0] : memref<8x4xf32, #tpu.memory_space<vmem>>, vector<8x4xf32>
    %c0_1 = arith.constant 0 : index
    %c0_2 = arith.constant 0 : index
    %1 = vector.load %arg2[%c0_1, %c0_2] : memref<4x32xf32, #tpu.memory_space<vmem>>, vector<4x32xf32>
    %cst = arith.constant dense<0.000000e+00> : vector<8x32xf32>
    %2 = tpu.matmul %0, %1, %cst {dimension_numbers = #tpu.dot_dimension_numbers<[1], [0], [0], [1], [0, 0, 1, 1], [], []>} : vector<8x4xf32>, vector<4x32xf32>, vector<8x32xf32> -> vector<8x32xf32>
    %c0_3 = arith.constant 0 : index
    %c0_4 = arith.constant 0 : index
    %3 = vector.load %arg3[%c0_3, %c0_4] : memref<1x32xf32, #tpu.memory_space<vmem>>, vector<1x32xf32>
    %4 = vector.broadcast %3 : vector<1x32xf32> to vector<8x32xf32>
    %5 = arith.addf %2, %4 : vector<8x32xf32>
    %cst_5 = arith.constant 0.000000e+00 : f32
    %6 = vector.broadcast %cst_5 : f32 to vector<8x32xf32>
    %7 = arith.maximumf %5, %6 : vector<8x32xf32>
    %c0_6 = arith.constant 0 : index
    %c0_7 = arith.constant 0 : index
    %8 = vector.load %arg4[%c0_6, %c0_7] : memref<32x32xf32, #tpu.memory_space<vmem>>, vector<32x32xf32>
    %cst_8 = arith.constant dense<0.000000e+00> : vector<8x32xf32>
    %9 = tpu.matmul %7, %8, %cst_8 {dimension_numbers = #tpu.dot_dimension_numbers<[1], [0], [0], [1], [0, 0, 1, 1], [], []>} : vector<8x32xf32>, vector<32x32xf32>, vector<8x32xf32> -> vector<8x32xf32>
    %c0_9 = arith.constant 0 : index
    %c0_10 = arith.constant 0 : index
    %10 = vector.load %arg5[%c0_9, %c0_10] : memref<1x32xf32, #tpu.memory_space<vmem>>, vector<1x32xf32>
    %11 = vector.broadcast %10 : vector<1x32xf32> to vector<8x32xf32>
    %12 = arith.addf %9, %11 : vector<8x32xf32>
    %cst_11 = arith.constant 0.000000e+00 : f32
    %13 = vector.broadcast %cst_11 : f32 to vector<8x32xf32>
    %14 = arith.maximumf %12, %13 : vector<8x32xf32>
    %c0_12 = arith.constant 0 : index
    %c0_13 = arith.constant 0 : index
    %15 = vector.load %arg6[%c0_12, %c0_13] : memref<1x32xf32, #tpu.memory_space<vmem>>, vector<1x32xf32>
    %16 = vector.broadcast %15 : vector<1x32xf32> to vector<8x32xf32>
    %17 = arith.mulf %14, %16 : vector<8x32xf32>
    %cst_14 = arith.constant dense<0.000000e+00> : vector<8xf32>
    %18 = vector.multi_reduction <add>, %17, %cst_14 [1] : vector<8x32xf32> to vector<8xf32>
    %19 = vector.shape_cast %18 : vector<8xf32> to vector<8x1xf32>
    %c0_15 = arith.constant 0 : index
    %c0_16 = arith.constant 0 : index
    %20 = vector.load %arg7[%c0_15, %c0_16] : memref<1x1xf32, #tpu.memory_space<vmem>>, vector<1x1xf32>
    %21 = vector.broadcast %20 : vector<1x1xf32> to vector<8x1xf32>
    %22 = arith.addf %19, %21 : vector<8x1xf32>
    %c0_17 = arith.constant 0 : index
    %c0_18 = arith.constant 0 : index
    %23 = vector.load %arg8[%c0_17, %c0_18] : memref<8x1xf32, #tpu.memory_space<vmem>>, vector<8x1xf32>
    tpu.vector_store %arg8[%c0_17, %c0_18], %22 {strides = array<i32>} : memref<8x1xf32, #tpu.memory_space<vmem>>, vector<8x1xf32>,
    return
  }
  func.func @transform_0(%arg0: i32) -> (i32, i32) {
    %c0_i32 = arith.constant 0 : i32
    %c0_i32_0 = arith.constant 0 : i32
    return %arg0, %c0_i32 : i32, i32
  }
  func.func @transform_1(%arg0: i32) -> (i32, i32) {
    %c0_i32 = arith.constant 0 : i32
    %c0_i32_0 = arith.constant 0 : i32
    %c0_i32_1 = arith.constant 0 : i32
    return %c0_i32, %c0_i32_0 : i32, i32
  }
  func.func @transform_2(%arg0: i32) -> (i32, i32) {
    %c0_i32 = arith.constant 0 : i32
    %c0_i32_0 = arith.constant 0 : i32
    %c0_i32_1 = arith.constant 0 : i32
    return %c0_i32, %c0_i32_0 : i32, i32
  }
  func.func @transform_3(%arg0: i32) -> (i32, i32) {
    %c0_i32 = arith.constant 0 : i32
    %c0_i32_0 = arith.constant 0 : i32
    %c0_i32_1 = arith.constant 0 : i32
    return %c0_i32, %c0_i32_0 : i32, i32
  }
  func.func @transform_4(%arg0: i32) -> (i32, i32) {
    %c0_i32 = arith.constant 0 : i32
    %c0_i32_0 = arith.constant 0 : i32
    %c0_i32_1 = arith.constant 0 : i32
    return %c0_i32, %c0_i32_0 : i32, i32
  }
  func.func @transform_5(%arg0: i32) -> (i32, i32) {
    %c0_i32 = arith.constant 0 : i32
    %c0_i32_0 = arith.constant 0 : i32
    %c0_i32_1 = arith.constant 0 : i32
    return %c0_i32, %c0_i32_0 : i32, i32
  }
  func.func @transform_6(%arg0: i32) -> (i32, i32) {
    %c0_i32 = arith.constant 0 : i32
    %c0_i32_0 = arith.constant 0 : i32
    %c0_i32_1 = arith.constant 0 : i32
    return %c0_i32, %c0_i32_0 : i32, i32
  }
  func.func @transform_7(%arg0: i32) -> (i32, i32) {
    %c0_i32 = arith.constant 0 : i32
    %c0_i32_0 = arith.constant 0 : i32
    return %arg0, %c0_i32 : i32, i32
  }
}

</mosaic_0001>

<llo_original>
// kernel: tpu_custom_call.1
$region0: #{tpu_custom_call.1}
  #allocation0 [shape = 'u32[]', space=smem, size = 0x4, offset = 0x4, fixed_abs, tag = 'smem constant byte address 0x4 - core index']
  #allocation1 [shape = 'u32[72,128]{1,0:T(1,128)}', space=vmem, size = 0x9000, scoped, tag = 'internal scratch']
  #allocation2 [shape = 'f32[1,1]{1,0:T(1,128)S(1)}', space=vmem, size = 0x200, scoped, tag = 'scoped memory for tpu_custom_call.1']
  %s0 = inlined_call_operand.vmem [shape: f32[8,4], index: 0, kind: input, shape index: {}]
  %s1 = inlined_call_operand.vmem [shape: f32[4,32], index: 1, kind: input, shape index: {}]
  %s2 = inlined_call_operand.vmem [shape: f32[1,32], index: 2, kind: input, shape index: {}]
  %s3 = inlined_call_operand.hbm [shape: f32[32,32], index: 3, kind: input, shape index: {}]
  %s4 = inlined_call_operand.vmem [shape: f32[1,32], index: 4, kind: input, shape index: {}]
  %s5 = inlined_call_operand.vmem [shape: f32[1,32], index: 5, kind: input, shape index: {}]
  %s6 = inlined_call_operand.<no memory space> [shape: f32[1,1], index: 6, kind: input, shape index: {}]
  %s7 = inlined_call_operand.vmem [shape: f32[8,1], index: 7, kind: output, shape index: {}]
  %s8 = sld [smem:[#allocation0]]
  $region42: #{tpu_custom_call.1} parent=0
    _
  %s10 = ssub.s32 1, %s8
  %s11 = scalar_select 0, %s10, %s8
  %v12 = vstv %s6
  %13 = vst [vmem:[#allocation2] sm:$0x1] %v12
  $region1: #{tpu_custom_call.1} parent=0
    #allocation3 [shape = 'u8[16384]{0}', space=vmem, size = 0x4000, scoped, tag = 'input window, operand 3, single buffered']
    #allocation4 [shape = 's32[1]{0}', space=sflag, size = 0x4, scoped, tag = 'scoped memory for tpu_custom_call.1']
    %14 = vsyncpa [#allocation4], 0
    // Predicated region
    $region2: #{tpu_custom_call.1} parent=1 // pred_check
      _
    $region3: #{tpu_custom_call.1} parent=1 // pred_check_branch
      %16 = sbr.rel (0) target = $region5
    $region4: #{tpu_custom_call.1} parent=1 // pred_region
      _
    $region5: #{tpu_custom_call.1} parent=1 // pred_fallthru
      _
    // Predicated region
    $region6: #{tpu_custom_call.1} parent=1 // pred_check
      _
    $region7: #{tpu_custom_call.1} parent=1 // pred_check_branch
      %18 = sbr.rel (0) target = $region9
    $region8: #{tpu_custom_call.1} parent=1 // pred_region
      _
    $region9: #{tpu_custom_call.1} parent=1 // pred_fallthru
      _
    // Predicated region
    $region10: #{tpu_custom_call.1} parent=1 // pred_check
      _
    $region11: #{tpu_custom_call.1} parent=1 // pred_check_branch
      %20 = sbr.rel (0) target = $region13
    $region12: #{tpu_custom_call.1} parent=1 // pred_region
      _
    $region13: #{tpu_custom_call.1} parent=1 // pred_fallthru
      _
    // Predicated region
    $region14: #{tpu_custom_call.1} parent=1 // pred_check
      _
    $region15: #{tpu_custom_call.1} parent=1 // pred_check_branch
      %22 = sbr.rel (0) target = $region17
    $region16: #{tpu_custom_call.1} parent=1 // pred_region
      %24 = vsyncadd [#allocation4], 0
      %s25 = sshll.u32 %s3, 4
      %s26 = int_to_ptr.hbm [resolvable:$true] %s25
      %s27 = sshll.u32 [#allocation3], 4
      %s28 = int_to_ptr.vmem [resolvable:$true] %s27
      %33 = dma.hbm_to_vmem [thread:$0]  %s26, 512, %s28, [#allocation4], 128, 128, 8
    $region17: #{tpu_custom_call.1} parent=1 // pred_fallthru
      _
    // Predicated region
    $region18: #{tpu_custom_call.1} parent=1 // pred_check
      _
    $region19: #{tpu_custom_call.1} parent=1 // pred_check_branch
      %35 = sbr.rel (0) target = $region21
    $region20: #{tpu_custom_call.1} parent=1 // pred_region
      _
    $region21: #{tpu_custom_call.1} parent=1 // pred_fallthru
      _
    // Predicated region
    $region22: #{tpu_custom_call.1} parent=1 // pred_check
      _
    $region23: #{tpu_custom_call.1} parent=1 // pred_check_branch
      %37 = sbr.rel (0) target = $region25
    $region24: #{tpu_custom_call.1} parent=1 // pred_region
      _
    $region25: #{tpu_custom_call.1} parent=1 // pred_fallthru
      _
    // Predicated region
    $region26: #{tpu_custom_call.1} parent=1 // pred_check
      _
    $region27: #{tpu_custom_call.1} parent=1 // pred_check_branch
      %39 = sbr.rel (0) target = $region29
    $region28: #{tpu_custom_call.1} parent=1 // pred_region
      _
    $region29: #{tpu_custom_call.1} parent=1 // pred_fallthru
      _
    // Predicated region
    $region30: #{tpu_custom_call.1} parent=1 // pred_check
      _
    $region31: #{tpu_custom_call.1} parent=1 // pred_check_branch
      %41 = sbr.rel (0) target = $region33
    $region32: #{tpu_custom_call.1} parent=1 // pred_region
      %43 = dma.done [#allocation4], 512
    $region33: #{tpu_custom_call.1} parent=1 // pred_fallthru
      _
    %v44 = vld [vmem:[%s0] sm:$0xff]
    %v45 = vld [vmem:[%s1] sm:$0xf]
    %v46 = vld [vmem:[%s2] sm:$0x1]
    %v48 = vperm.slane %v46, 0
    %vm50 = vcmask 31744
    %v52 = vsel %vm50, %v44, 0
    %vm54 = vcmask 1043456
    %v56 = vsel %vm54, %v45, 0
    %58 = vmatpush.msra.mxu0 0.0
    %59 = vmatpush.msra.mxu0 0.0
    %60 = vmatpush.msra.mxu0 0.0
    %61 = vmatpush.msra.mxu0 0.0
    %62 = vmatpush.msra.mxu0 0.0
    %63 = vmatpush.msra.mxu0 0.0
    %64 = vmatpush.msra.mxu0 0.0
    %65 = vmatpush.msra.mxu0 0.0
    %66 = vmatpush.msra.mxu0 0.0
    %67 = vmatpush.msra.mxu0 0.0
    %68 = vmatpush.msra.mxu0 0.0
    %69 = vmatpush.msra.mxu0 0.0
    %70 = vmatpush.msra.mxu0 0.0
    %71 = vmatpush.msra.mxu0 0.0
    %72 = vmatpush.msra.mxu0 0.0
    %73 = vmatpush.msra.mxu0 %v56
    %74 = vmatmul.f32.gmra.mxu0 %v52
    %v75 = vpop.f32.mrf.mxu0
    %v76 = vadd.f32 %v48, %v75
    %77 = vdwg.mxu0
    %v78 = vmax.f32 %v76, 0.0
    %v79 = vld [vmem:[#allocation3] sm:$0xff]
    %v80 = vld [vmem:[#allocation3 + $0x8] sm:$0xff]
    %v81 = vld [vmem:[#allocation3 + $0x10] sm:$0xff]
    %v82 = vld [vmem:[#allocation3 + $0x18] sm:$0xff]
    %v83 = vld [vmem:[%s4] sm:$0x1]
    %v85 = vperm.slane %v83, 0
    %vm87 = vcmask 261120
    %v89 = vsel %vm87, %v78, 0
    %91 = vmatpush.msra.mxu0 0.0
    %92 = vmatpush.msra.mxu0 0.0
    %93 = vmatpush.msra.mxu0 0.0
    %94 = vmatpush.msra.mxu0 0.0
    %95 = vmatpush.msra.mxu0 0.0
    %96 = vmatpush.msra.mxu0 0.0
    %97 = vmatpush.msra.mxu0 0.0
    %98 = vmatpush.msra.mxu0 0.0
    %99 = vmatpush.msra.mxu0 0.0
    %100 = vmatpush.msra.mxu0 0.0
    %101 = vmatpush.msra.mxu0 0.0
    %102 = vmatpush.msra.mxu0 0.0
    %103 = vmatpush.msra.mxu0 %v82
    %104 = vmatpush.msra.mxu0 %v81
    %105 = vmatpush.msra.mxu0 %v80
    %106 = vmatpush.msra.mxu0 %v79
    %107 = vmatmul.f32.gmra.mxu0 %v89
    %v108 = vpop.f32.mrf.mxu0
    %v109 = vadd.f32 %v85, %v108
    %110 = vdwg.mxu0
    %v111 = vmax.f32 %v109, 0.0
    %v112 = vld [vmem:[%s5] sm:$0x1]
    %v114 = vperm.slane %v112, 0
    %v116 = vmul.f32 %v111, %v114
    %v117 = vsel %vm87, %v116, 0.0
    %118 = vadd.xlane.f32.xlu0 %v117
    %v119 = vpop.xlane.xlu0 %118
    %v120 = vld [vmem:[#allocation2] sm:$0x1]
    %v122 = vperm.slane %v120, 0
    %v124 = vadd.f32 %v119, %v122
    %vm125 = vcmask 7168
    %126 = vst.msk [vmem:[%s7] sm:$0xff] %vm125, %v124
    // Predicated region
    $region34: #{tpu_custom_call.1} parent=1 // pred_check
      _
    $region35: #{tpu_custom_call.1} parent=1 // pred_check_branch
      %128 = sbr.rel (0) target = $region37
    $region36: #{tpu_custom_call.1} parent=1 // pred_region
      _
    $region37: #{tpu_custom_call.1} parent=1 // pred_fallthru
      _
    // Predicated region
    $region38: #{tpu_custom_call.1} parent=1 // pred_check
      _
    $region39: #{tpu_custom_call.1} parent=1 // pred_check_branch
      %130 = sbr.rel (0) target = $region41
    $region40: #{tpu_custom_call.1} parent=1 // pred_region
      _
    $region41: #{tpu_custom_call.1} parent=1 // pred_fallthru
      _
    %131 = vsyncpa [#allocation4], 1

</llo_original>
